<compile_context>
chip_gen: v5e
topology: v5e:2x2
jax: 0.10.0
libtpu: 0.0.40
codegen_flags: <defaults>
</compile_context>

<pallas_src>
import jax
import jax.numpy as jnp
from jax.experimental import pallas as pl
from jax.experimental.pallas import tpu as pltpu


def _round_up(x: int, m: int) -> int:
    return ((x + m - 1) // m) * m


def _cdiv(a: int, b: int) -> int:
    return -(-a // b)


def reconstruction_loss(
    inp: jax.Array,
    target: jax.Array,
    *,
    block_rows=None,
    tile_budget_bytes: int = 2 * 1024 * 1024,
    num_parallel: int = 2,
    vmem_limit_bytes: int = 48 * 1024 * 1024,
):
    """Masked sum-of-squares loss for 2-D (batch, n_items). Returns (loss, count)."""
    assert inp.shape == target.shape and inp.ndim == 2
    B, N = inp.shape

    itemsize = max(jnp.dtype(inp.dtype).itemsize, jnp.dtype(target.dtype).itemsize)
    if block_rows is None:
        # Fill ~tile_budget_bytes per input per tile; a multiple of 16 rows covers
        # both f32 (8-sublane) and bf16 (16-sublane) tiling.
        block_rows = max(16, (tile_budget_bytes // max(1, N * itemsize)) // 16 * 16)
    block_rows = _round_up(int(block_rows), 16)
    block_rows = min(block_rows, _round_up(B, 16))   # don't exceed (padded) batch

    total_blocks = _cdiv(B, block_rows)
    P = max(1, min(num_parallel, total_blocks))      # partial slices (v7x: one per TC)
    bpg = _cdiv(total_blocks, P)                     # row-blocks per slice

    def kernel(x_ref, t_ref, loss_ref, cnt_ref, loss_acc, cnt_acc):
        p = pl.program_id(0)
        i = pl.program_id(1)

        @pl.when(i == 0)
        def _():
            loss_acc[...] = jnp.zeros_like(loss_acc)
            cnt_acc[...] = jnp.zeros_like(cnt_acc)

        x = x_ref[...].astype(jnp.float32)
        t = t_ref[...].astype(jnp.float32)

        # Row-validity mask: the last block may run past B (ragged batch) and the
        # rectangularized (P, bpg) grid may revisit a clamped block; both masked here.
        row_ids = (p * bpg + i) * block_rows + jax.lax.broadcasted_iota(
            jnp.int32, x.shape, 0
        )
        # -1.0 survives a bf16 round-trip exactly, so comparing the f32 upcast
        # against -1.0 matches the PyTorch `target != -1` mask.
        observed = (t != jnp.float32(-1.0)) & (row_ids < B)

        diff = jnp.where(observed, x - t, jnp.float32(0.0))
        # Per-step partial reduce over rows only (VPU adds + one sublane reduce);
        # stays in VMEM vector accumulators — no scalar/SMEM RMW per step.
        loss_acc[...] += jnp.sum(diff * diff, axis=0, keepdims=True)
        cnt_acc[...] += jnp.sum(observed.astype(jnp.int32), axis=0, keepdims=True)

        @pl.when(i == pl.num_programs(1) - 1)
        def _():
            loss_ref[...] = loss_acc[...]
            cnt_ref[...] = cnt_acc[...]

    def in_map(p, i):
        # Clamp to the last real block; revisited blocks are fully row-masked.
        return (jnp.minimum(p * bpg + i, total_blocks - 1), 0)

    loss_parts, cnt_parts = pl.pallas_call(
        kernel,
        out_shape=(
            jax.ShapeDtypeStruct((P, 1, N), jnp.float32),
            jax.ShapeDtypeStruct((P, 1, N), jnp.int32),
        ),
        grid_spec=pltpu.PrefetchScalarGridSpec(
            num_scalar_prefetch=0,
            grid=(P, bpg),
            in_specs=[
                pl.BlockSpec((block_rows, N), in_map),
                pl.BlockSpec((block_rows, N), in_map),
            ],
            out_specs=(
                pl.BlockSpec((None, 1, N), lambda p, i: (p, 0, 0)),
                pl.BlockSpec((None, 1, N), lambda p, i: (p, 0, 0)),
            ),
            scratch_shapes=[
                pltpu.VMEM((1, N), jnp.float32),
                pltpu.VMEM((1, N), jnp.int32),
            ],
        ),
        compiler_params=pltpu.CompilerParams(
            dimension_semantics=("parallel", "arbitrary"),
            vmem_limit_bytes=vmem_limit_bytes,
        ),
    )(inp, target)

    # Tiny final reductions over per-slice, lane-dense partials (done in XLA).
    return jnp.sum(loss_parts), jnp.sum(cnt_parts)


def _reference(inp, target):
    inp = inp.astype(jnp.float32)
    target = target.astype(jnp.float32)
    mask = target != -1.0
    diff = jnp.where(mask, inp - target, 0.0)
    return jnp.sum(diff * diff), jnp.sum(mask.astype(jnp.int32))


if __name__ == "__main__":
    key = jax.random.PRNGKey(0)
    k1, k2, k3, k4, k5, k6 = jax.random.split(key, 6)

    # Test 1: small AutoRec-style (batch, n_items) slab, f32, single block.
    B, N = 16, 256
    inp = jax.random.normal(k1, (B, N), dtype=jnp.float32)
    ratings = jax.random.uniform(k2, (B, N), minval=1.0, maxval=5.0, dtype=jnp.float32)
    observed = jax.random.bernoulli(k3, p=0.3, shape=(B, N))
    target = jnp.where(observed, ratings, jnp.float32(-1.0))  # -1 marks unobserved

    loss, count = reconstruction_loss(inp, target)
    loss = jax.block_until_ready(loss)
    count = jax.block_until_ready(count)
    ref_loss, ref_count = _reference(inp, target)
    assert int(count) == int(ref_count), (int(count), int(ref_count))
    assert jnp.allclose(loss, ref_loss, rtol=1e-5, atol=1e-2), (float(loss), float(ref_loss))

    # Test 2: ragged batch + bf16 inputs + forced small tile to exercise the
    # multi-block / clamped-block / two-partial (megacore) path.
    B2, N2 = 100, 384
    inp2 = jax.random.normal(k4, (B2, N2), dtype=jnp.float32).astype(jnp.bfloat16)
    ratings2 = jax.random.uniform(k5, (B2, N2), minval=1.0, maxval=5.0)
    observed2 = jax.random.bernoulli(k6, p=0.25, shape=(B2, N2))
    target2 = jnp.where(observed2, ratings2, -1.0).astype(jnp.bfloat16)

    loss2, count2 = reconstruction_loss(inp2, target2, block_rows=16)
    loss2 = jax.block_until_ready(loss2)
    count2 = jax.block_until_ready(count2)
    ref_loss2, ref_count2 = _reference(inp2, target2)
    assert int(count2) == int(ref_count2), (int(count2), int(ref_count2))
    assert jnp.allclose(loss2, ref_loss2, rtol=1e-4, atol=1e-1), (float(loss2), float(ref_loss2))

    # Host-side equivalent of normalize_loss_reset (stateful counter lives in Python).
    _mean_loss = float(loss) / int(count)

    print("KERNEL_OK")
</pallas_src>

<mosaic_0001>
module attributes {stable_mosaic.version = 11 : i64} {
  func.func @kernel(%arg0: i32, %arg1: i32, %arg2: memref<16x256xf32, #tpu.memory_space<vmem>>, %arg3: memref<16x256xf32, #tpu.memory_space<vmem>>, %arg4: memref<1x1x256xf32, #tpu.memory_space<vmem>>, %arg5: memref<1x1x256xi32, #tpu.memory_space<vmem>>, %arg6: memref<1x256xf32, #tpu.memory_space<vmem>>, %arg7: memref<1x256xi32, #tpu.memory_space<vmem>>) attributes {dimension_semantics = [#tpu.dimension_semantics<parallel>, #tpu.dimension_semantics<arbitrary>], iteration_bounds = array<i64: 1, 1>, scalar_prefetch = 0 : i64, scratch_operands = 2 : i64, tpu.core_type = #tpu.core_type<tc>, window_params = [{transform_indices = @transform_0, window_bounds = array<i64: 16, 256>}, {transform_indices = @transform_1, window_bounds = array<i64: 16, 256>}, {transform_indices = @transform_2, window_bounds = array<i64: 1, 1, 256>}, {transform_indices = @transform_3, window_bounds = array<i64: 1, 1, 256>}]} {
    %c0_i32 = arith.constant 0 : i32
    %0 = arith.cmpi eq, %arg1, %c0_i32 : i32
    %1 = arith.extui %0 : i1 to i32
    %c0_i32_0 = arith.constant 0 : i32
    %2 = arith.cmpi ne, %1, %c0_i32_0 : i32
    scf.if %2 {
      %cst_18 = arith.constant 0.000000e+00 : f32
      %34 = vector.broadcast %cst_18 : f32 to vector<1x256xf32>
      %c0_19 = arith.constant 0 : index
      %c0_20 = arith.constant 0 : index
      %35 = vector.load %arg6[%c0_19, %c0_20] : memref<1x256xf32, #tpu.memory_space<vmem>>, vector<1x256xf32>
      tpu.vector_store %arg6[%c0_19, %c0_20], %34 {strides = array<i32>} : memref<1x256xf32, #tpu.memory_space<vmem>>, vector<1x256xf32>,
      %c0_i32_21 = arith.constant 0 : i32
      %36 = vector.broadcast %c0_i32_21 : i32 to vector<1x256xi32>
      %c0_22 = arith.constant 0 : index
      %c0_23 = arith.constant 0 : index
      %37 = vector.load %arg7[%c0_22, %c0_23] : memref<1x256xi32, #tpu.memory_space<vmem>>, vector<1x256xi32>
      tpu.vector_store %arg7[%c0_22, %c0_23], %36 {strides = array<i32>} : memref<1x256xi32, #tpu.memory_space<vmem>>, vector<1x256xi32>,
    } else {
    }
    %c0 = arith.constant 0 : index
    %c0_1 = arith.constant 0 : index
    %3 = vector.load %arg2[%c0, %c0_1] : memref<16x256xf32, #tpu.memory_space<vmem>>, vector<16x256xf32>
    %c0_2 = arith.constant 0 : index
    %c0_3 = arith.constant 0 : index
    %4 = vector.load %arg3[%c0_2, %c0_3] : memref<16x256xf32, #tpu.memory_space<vmem>>, vector<16x256xf32>
    %c1_i32 = arith.constant 1 : i32
    %5 = arith.muli %arg0, %c1_i32 : i32
    %6 = arith.addi %5, %arg1 : i32
    %c16_i32 = arith.constant 16 : i32
    %7 = arith.muli %6, %c16_i32 : i32
    %8 = tpu.iota {dimensions = array<i32: 0>} : vector<16x256xi32>
    %9 = vector.broadcast %7 : i32 to vector<16x256xi32>
    %10 = arith.addi %9, %8 : vector<16x256xi32>
    %cst = arith.constant -1.000000e+00 : f32
    %11 = vector.broadcast %cst : f32 to vector<16x256xf32>
    %12 = arith.cmpf one, %4, %11 : vector<16x256xf32>
    %c16_i32_4 = arith.constant 16 : i32
    %13 = vector.broadcast %c16_i32_4 : i32 to vector<16x256xi32>
    %14 = arith.cmpi slt, %10, %13 : vector<16x256xi32>
    %15 = arith.andi %12, %14 : vector<16x256xi1>
    %16 = arith.subf %3, %4 : vector<16x256xf32>
    %cst_5 = arith.constant 0.000000e+00 : f32
    %17 = vector.broadcast %cst_5 : f32 to vector<16x256xf32>
    %18 = arith.select %15, %16, %17 : vector<16x256xi1>, vector<16x256xf32>
    %c0_6 = arith.constant 0 : index
    %c0_7 = arith.constant 0 : index
    %19 = vector.load %arg6[%c0_6, %c0_7] : memref<1x256xf32, #tpu.memory_space<vmem>>, vector<1x256xf32>
    %20 = arith.mulf %18, %18 : vector<16x256xf32>
    %cst_8 = arith.constant dense<0.000000e+00> : vector<256xf32>
    %21 = vector.multi_reduction <add>, %20, %cst_8 [0] : vector<16x256xf32> to vector<256xf32>
    %22 = vector.shape_cast %21 : vector<256xf32> to vector<1x256xf32>
    %23 = arith.addf %19, %22 : vector<1x256xf32>
    %c0_9 = arith.constant 0 : index
    %c0_10 = arith.constant 0 : index
    %24 = vector.load %arg6[%c0_9, %c0_10] : memref<1x256xf32, #tpu.memory_space<vmem>>, vector<1x256xf32>
    tpu.vector_store %arg6[%c0_9, %c0_10], %23 {strides = array<i32>} : memref<1x256xf32, #tpu.memory_space<vmem>>, vector<1x256xf32>,
    %c0_11 = arith.constant 0 : index
    %c0_12 = arith.constant 0 : index
    %25 = vector.load %arg7[%c0_11, %c0_12] : memref<1x256xi32, #tpu.memory_space<vmem>>, vector<1x256xi32>
    %26 = arith.extui %15 : vector<16x256xi1> to vector<16x256xi32>
    %cst_13 = arith.constant dense<0> : vector<256xi32>
    %27 = vector.multi_reduction <add>, %26, %cst_13 [0] : vector<16x256xi32> to vector<256xi32>
    %28 = vector.shape_cast %27 : vector<256xi32> to vector<1x256xi32>
    %29 = arith.addi %25, %28 : vector<1x256xi32>
    %c0_14 = arith.constant 0 : index
    %c0_15 = arith.constant 0 : index
    %30 = vector.load %arg7[%c0_14, %c0_15] : memref<1x256xi32, #tpu.memory_space<vmem>>, vector<1x256xi32>
    tpu.vector_store %arg7[%c0_14, %c0_15], %29 {strides = array<i32>} : memref<1x256xi32, #tpu.memory_space<vmem>>, vector<1x256xi32>,
    %c0_i32_16 = arith.constant 0 : i32
    %31 = arith.cmpi eq, %arg1, %c0_i32_16 : i32
    %32 = arith.extui %31 : i1 to i32
    %c0_i32_17 = arith.constant 0 : i32
    %33 = arith.cmpi ne, %32, %c0_i32_17 : i32
    scf.if %33 {
      %c0_18 = arith.constant 0 : index
      %c0_19 = arith.constant 0 : index
      %34 = vector.load %arg6[%c0_18, %c0_19] : memref<1x256xf32, #tpu.memory_space<vmem>>, vector<1x256xf32>
      %c0_20 = arith.constant 0 : index
      %c0_21 = arith.constant 0 : index
      %c0_22 = arith.constant 0 : index
      %35 = vector.load %arg4[%c0_20, %c0_21, %c0_22] : memref<1x1x256xf32, #tpu.memory_space<vmem>>, vector<1x1x256xf32>
      %36 = vector.shape_cast %35 : vector<1x1x256xf32> to vector<1x256xf32>
      %37 = vector.shape_cast %34 : vector<1x256xf32> to vector<1x1x256xf32>
      tpu.vector_store %arg4[%c0_20, %c0_21, %c0_22], %37 {strides = array<i32>} : memref<1x1x256xf32, #tpu.memory_space<vmem>>, vector<1x1x256xf32>,
      %c0_23 = arith.constant 0 : index
      %c0_24 = arith.constant 0 : index
      %38 = vector.load %arg7[%c0_23, %c0_24] : memref<1x256xi32, #tpu.memory_space<vmem>>, vector<1x256xi32>
      %c0_25 = arith.constant 0 : index
      %c0_26 = arith.constant 0 : index
      %c0_27 = arith.constant 0 : index
      %39 = vector.load %arg5[%c0_25, %c0_26, %c0_27] : memref<1x1x256xi32, #tpu.memory_space<vmem>>, vector<1x1x256xi32>
      %40 = vector.shape_cast %39 : vector<1x1x256xi32> to vector<1x256xi32>
      %41 = vector.shape_cast %38 : vector<1x256xi32> to vector<1x1x256xi32>
      tpu.vector_store %arg5[%c0_25, %c0_26, %c0_27], %41 {strides = array<i32>} : memref<1x1x256xi32, #tpu.memory_space<vmem>>, vector<1x1x256xi32>,
    } else {
    }
    return
  }
  func.func @transform_0(%arg0: i32, %arg1: i32) -> (i32, i32) {
    %c1_i32 = arith.constant 1 : i32
    %0 = arith.muli %arg0, %c1_i32 : i32
    %1 = arith.addi %0, %arg1 : i32
    %c0_i32 = arith.constant 0 : i32
    %2 = arith.minsi %1, %c0_i32 : i32
    %c0_i32_0 = arith.constant 0 : i32
    %c0_i32_1 = arith.constant 0 : i32
    return %2, %c0_i32_0 : i32, i32
  }
  func.func @transform_1(%arg0: i32, %arg1: i32) -> (i32, i32) {
    %c1_i32 = arith.constant 1 : i32
    %0 = arith.muli %arg0, %c1_i32 : i32
    %1 = arith.addi %0, %arg1 : i32
    %c0_i32 = arith.constant 0 : i32
    %2 = arith.minsi %1, %c0_i32 : i32
    %c0_i32_0 = arith.constant 0 : i32
    %c0_i32_1 = arith.constant 0 : i32
    return %2, %c0_i32_0 : i32, i32
  }
  func.func @transform_2(%arg0: i32, %arg1: i32) -> (i32, i32, i32) {
    %c0_i32 = arith.constant 0 : i32
    %c0_i32_0 = arith.constant 0 : i32
    %c0_i32_1 = arith.constant 0 : i32
    return %arg0, %c0_i32, %c0_i32_0 : i32, i32, i32
  }
  func.func @transform_3(%arg0: i32, %arg1: i32) -> (i32, i32, i32) {
    %c0_i32 = arith.constant 0 : i32
    %c0_i32_0 = arith.constant 0 : i32
    %c0_i32_1 = arith.constant 0 : i32
    return %arg0, %c0_i32, %c0_i32_0 : i32, i32, i32
  }
}

</mosaic_0001>

<llo_original>
// kernel: tpu_custom_call.1
$region0: #{tpu_custom_call.1}
  #allocation0 [shape = 'u32[]', space=smem, size = 0x4, offset = 0x4, fixed_abs, tag = 'smem constant byte address 0x4 - core index']
  #allocation1 [shape = 'u32[72,128]{1,0:T(1,128)}', space=vmem, size = 0x9000, scoped, tag = 'internal scratch']
  #allocation2 [shape = 'f32[1,256]{1,0:T(1,128)}', space=vmem, size = 0x400, scoped, tag = 'scratch operand']
  #allocation3 [shape = 's32[1,256]{1,0:T(1,128)}', space=vmem, size = 0x400, scoped, tag = 'scratch operand']
  %s0 = inlined_call_operand.hbm [shape: f32[16,256], index: 0, kind: input, shape index: {}]
  %s1 = inlined_call_operand.hbm [shape: f32[16,256], index: 1, kind: input, shape index: {}]
  %s2 = inlined_call_operand.hbm [shape: f32[1,1,256], index: 2, kind: output, shape index: {0}]
  %s3 = inlined_call_operand.hbm [shape: s32[1,1,256], index: 3, kind: output, shape index: {1}]
  %4 = xla_tuple %s2, %s3
  %s5 = sld [smem:[#allocation0]]
  $region42: #{tpu_custom_call.1} parent=0
    _
  %s7 = ssub.s32 1, %s5
  %s8 = scalar_select 0, %s7, %s5
  $region1: #{tpu_custom_call.1} parent=0
    #allocation4 [shape = 'u8[16384]{0}', space=vmem, size = 0x4000, scoped, tag = 'input window, operand 0, single buffered']
    #allocation5 [shape = 's32[1]{0}', space=sflag, size = 0x4, scoped, tag = 'scoped memory for tpu_custom_call.1']
    #allocation6 [shape = 's32[1]{0}', space=sflag, size = 0x4, scoped, tag = 'scoped memory for tpu_custom_call.1']
    #allocation7 [shape = 'u8[16384]{0}', space=vmem, size = 0x4000, scoped, tag = 'input window, operand 1, single buffered']
    #allocation8 [shape = 's32[1]{0}', space=sflag, size = 0x4, scoped, tag = 'scoped memory for tpu_custom_call.1']
    #allocation9 [shape = 'u8[1024]{0}', space=vmem, size = 0x400, scoped, tag = 'output window, operand 0, single buffered']
    #allocation10 [shape = 'u8[1024]{0}', space=vmem, size = 0x400, scoped, tag = 'output window, operand 1, single buffered']
    #allocation11 [shape = 's32[1]{0}', space=sflag, size = 0x4, scoped, tag = 'scoped memory for tpu_custom_call.1']
    %9 = vsyncpa [#allocation5], 0
    %10 = vsyncpa [#allocation8], 0
    %11 = vsyncpa [#allocation6], 0
    %12 = vsyncpa [#allocation11], 0
    // Predicated region
    $region2: #{tpu_custom_call.1} parent=1 // pred_check
      _
    $region3: #{tpu_custom_call.1} parent=1 // pred_check_branch
      %14 = sbr.rel (0) target = $region5
    $region4: #{tpu_custom_call.1} parent=1 // pred_region
      %s15 = sadd.s32 0, 0
      %p16 = scmp.lt.s32.totalorder %s15, 0
      %s17 = scalar_select %p16, %s15, 0
      %s18 = smul.u32 2, %s17
      %20 = vsyncadd [#allocation5], 0
      %s21 = smul.addr %s18, 2
      %s22 = smul.addr %s21, 8
      %s23 = scalar_lea.hbm %s0, %s22
      %s24 = sshll.u32 %s23, 4
      %s25 = int_to_ptr.hbm [resolvable:$true] %s24
      %s26 = sshll.u32 [#allocation4], 4
      %s27 = int_to_ptr.vmem [resolvable:$true] %s26
      %32 = dma.hbm_to_vmem [thread:$0]  %s25, 512, %s27, [#allocation5], 256, 256, 16
    $region5: #{tpu_custom_call.1} parent=1 // pred_fallthru
      _
    // Predicated region
    $region6: #{tpu_custom_call.1} parent=1 // pred_check
      _
    $region7: #{tpu_custom_call.1} parent=1 // pred_check_branch
      %34 = sbr.rel (0) target = $region9
    $region8: #{tpu_custom_call.1} parent=1 // pred_region
      %s35 = sadd.s32 0, 0
      %p36 = scmp.lt.s32.totalorder %s35, 0
      %s37 = scalar_select %p36, %s35, 0
      %s38 = smul.u32 2, %s37
      %40 = vsyncadd [#allocation8], 0
      %s41 = smul.addr %s38, 2
      %s42 = smul.addr %s41, 8
      %s43 = scalar_lea.hbm %s1, %s42
      %s44 = sshll.u32 %s43, 4
      %s45 = int_to_ptr.hbm [resolvable:$true] %s44
      %s46 = sshll.u32 [#allocation7], 4
      %s47 = int_to_ptr.vmem [resolvable:$true] %s46
      %52 = dma.hbm_to_vmem [thread:$0]  %s45, 512, %s47, [#allocation8], 256, 256, 16
    $region9: #{tpu_custom_call.1} parent=1 // pred_fallthru
      _
    // Predicated region
    $region10: #{tpu_custom_call.1} parent=1 // pred_check
      _
    $region11: #{tpu_custom_call.1} parent=1 // pred_check_branch
      %54 = sbr.rel (0) target = $region13
    $region12: #{tpu_custom_call.1} parent=1 // pred_region
      %56 = dma.done [#allocation5], 512
    $region13: #{tpu_custom_call.1} parent=1 // pred_fallthru
      _
    // Predicated region
    $region14: #{tpu_custom_call.1} parent=1 // pred_check
      _
    $region15: #{tpu_custom_call.1} parent=1 // pred_check_branch
      %58 = sbr.rel (0) target = $region17
    $region16: #{tpu_custom_call.1} parent=1 // pred_region
      %60 = dma.done [#allocation8], 512
    $region17: #{tpu_custom_call.1} parent=1 // pred_fallthru
      _
    %s61 = sadd.s32 0, 0
    %p62 = scmp.lt.s32.totalorder %s61, 0
    %s63 = scalar_select %p62, %s61, 0
    %s64 = smul.u32 2, %s63
    %s65 = sadd.s32 0, 0
    %p66 = scmp.lt.s32.totalorder %s65, 0
    %s67 = scalar_select %p66, %s65, 0
    %s68 = smul.u32 2, %s67
    %p69 = scmp.eq.s32.totalorder 0, 0
    // Predicated region
    $region18: #{tpu_custom_call.1} parent=1 // pred_check
      %p70 = pneg %p69
    $region19: #{tpu_custom_call.1} parent=1 // pred_check_branch
      %72 = sbr.rel (%p70) target = $region21
    $region20: #{tpu_custom_call.1} parent=1 // pred_region
      %v73 = vlaneseq
      %vm74 = vcmp.ge.s32.totalorder %v73, 0
      %vm75 = vcmp.lt.s32.totalorder %v73, 256
      %vm76 = vmand %vm74, %vm75
      %77 = vst.msk [vmem:[#allocation2] sm:$0x3] %vm76, 0.0
      %78 = vst.msk [vmem:[#allocation3] sm:$0x3] %vm76, 0
    $region21: #{tpu_custom_call.1} parent=1 // pred_fallthru
      _
    %v79 = vld [vmem:[#allocation4] sm:$0xff]
    %v80 = vld [vmem:[#allocation4 + $0x8] sm:$0xff]
    %v81 = vld [vmem:[#allocation4 + $0x10] sm:$0xff]
    %v82 = vld [vmem:[#allocation4 + $0x18] sm:$0xff]
    %v83 = vld [vmem:[#allocation7] sm:$0xff]
    %v84 = vld [vmem:[#allocation7 + $0x8] sm:$0xff]
    %v85 = vld [vmem:[#allocation7 + $0x10] sm:$0xff]
    %v86 = vld [vmem:[#allocation7 + $0x18] sm:$0xff]
    %s87 = sadd.s32 0, 0
    %s88 = smul.u32 %s87, 16
    %v89 = vlaneseq
    %v90 = vshrl.u32 %v89, 7
    %v91 = vadd.s32 %v90, 8
    %v92 = vstv %s88
    %v93 = vadd.s32 %v92, %v90
    %v94 = vadd.s32 %v92, %v91
    %vm95 = vcmp.ne.f32.partialorder %v83, -1.0
    %vm96 = vcmp.ne.f32.partialorder %v84, -1.0
    %vm97 = vcmp.ne.f32.partialorder %v85, -1.0
    %vm98 = vcmp.ne.f32.partialorder %v86, -1.0
    %vm99 = vcmp.lt.s32.totalorder %v93, 16
    %vm100 = vcmp.lt.s32.totalorder %v94, 16
    %vm101 = vmand %vm95, %vm99
    %vm102 = vmand %vm96, %vm99
    %vm103 = vmand %vm97, %vm100
    %vm104 = vmand %vm98, %vm100
    %v105 = vsub.f32 %v79, %v83
    %v106 = vsub.f32 %v80, %v84
    %v107 = vsub.f32 %v81, %v85
    %v108 = vsub.f32 %v82, %v86
    %v109 = vsel %vm101, %v105, 0.0
    %v110 = vsel %vm102, %v106, 0.0
    %v111 = vsel %vm103, %v107, 0.0
    %v112 = vsel %vm104, %v108, 0.0
    %v113 = vld [vmem:[#allocation2] sm:$0x3]
    %v114 = vmul.f32 %v109, %v109
    %v115 = vmul.f32 %v110, %v110
    %v116 = vmul.f32 %v111, %v111
    %v117 = vmul.f32 %v112, %v112
    %v118 = vadd.f32 %v114, %v116
    %v119 = vrot.slane %v118, 4
    %v120 = vadd.f32 %v118, %v119
    %v121 = vrot.slane %v120, 2
    %v122 = vadd.f32 %v120, %v121
    %v123 = vrot.slane %v122, 1
    %v124 = vadd.f32 %v122, %v123
    %v125 = vadd.f32 %v115, %v117
    %v126 = vrot.slane %v125, 4
    %v127 = vadd.f32 %v125, %v126
    %v128 = vrot.slane %v127, 2
    %v129 = vadd.f32 %v127, %v128
    %v130 = vrot.slane %v129, 1
    %v131 = vadd.f32 %v129, %v130
    %v134 = vrot.slane %v131, 7
    %vm135 = vcmask 1040384
    %v136 = vsel %vm135, %v124, %v134
    %v138 = vadd.f32 %v113, %v136
    %v139 = vlaneseq
    %vm140 = vcmp.ge.s32.totalorder %v139, 0
    %vm141 = vcmp.lt.s32.totalorder %v139, 256
    %vm142 = vmand %vm140, %vm141
    %143 = vst.msk [vmem:[#allocation2] sm:$0x3] %vm142, %v138
    %v144 = vld [vmem:[#allocation3] sm:$0x3]
    %v145 = vsel %vm101, 1, 0
    %v146 = vsel %vm102, 1, 0
    %v147 = vsel %vm103, 1, 0
    %v148 = vsel %vm104, 1, 0
    %v149 = vadd.s32 %v145, %v147
    %v150 = vrot.slane %v149, 4
    %v151 = vadd.s32 %v149, %v150
    %v152 = vrot.slane %v151, 2
    %v153 = vadd.s32 %v151, %v152
    %v154 = vrot.slane %v153, 1
    %v155 = vadd.s32 %v153, %v154
    %v156 = vadd.s32 %v146, %v148
    %v157 = vrot.slane %v156, 4
    %v158 = vadd.s32 %v156, %v157
    %v159 = vrot.slane %v158, 2
    %v160 = vadd.s32 %v158, %v159
    %v161 = vrot.slane %v160, 1
    %v162 = vadd.s32 %v160, %v161
    %v163 = vrot.slane %v162, 7
    %v164 = vsel %vm135, %v155, %v163
    %v165 = vadd.s32 %v144, %v164
    %166 = vst.msk [vmem:[#allocation3] sm:$0x3] %vm142, %v165
    // Predicated region
    $region22: #{tpu_custom_call.1} parent=1 // pred_check
      %p167 = pneg %p69
    $region23: #{tpu_custom_call.1} parent=1 // pred_check_branch
      %169 = sbr.rel (%p167) target = $region25
    $region24: #{tpu_custom_call.1} parent=1 // pred_region
      %v170 = vld [vmem:[#allocation2] sm:$0x3]
      %171 = vst.msk [vmem:[#allocation9] sm:$0x3] %vm142, %v170
      %v172 = vld [vmem:[#allocation3] sm:$0x3]
      %173 = vst.msk [vmem:[#allocation10] sm:$0x3] %vm142, %v172
    $region25: #{tpu_custom_call.1} parent=1 // pred_fallthru
      _
    // Predicated region
    $region26: #{tpu_custom_call.1} parent=1 // pred_check
      _
    $region27: #{tpu_custom_call.1} parent=1 // pred_check_branch
      %175 = sbr.rel (0) target = $region29
    $region28: #{tpu_custom_call.1} parent=1 // pred_region
      %177 = vsyncadd [#allocation6], 0
      %s179 = sshll.u32 [#allocation9], 4
      %s180 = int_to_ptr.vmem [resolvable:$true] %s179
      %s181 = sshll.u32 %s2, 4
      %s182 = int_to_ptr.hbm [resolvable:$true] %s181
      %184 = dma.vmem_to_hbm [thread:$0]  %s180, 32, %s182, [#allocation6]
    $region29: #{tpu_custom_call.1} parent=1 // pred_fallthru
      _
    // Predicated region
    $region30: #{tpu_custom_call.1} parent=1 // pred_check
      _
    $region31: #{tpu_custom_call.1} parent=1 // pred_check_branch
      %186 = sbr.rel (0) target = $region33
    $region32: #{tpu_custom_call.1} parent=1 // pred_region
      %188 = vsyncadd [#allocation11], 0
      %s190 = sshll.u32 [#allocation10], 4
      %s191 = int_to_ptr.vmem [resolvable:$true] %s190
      %s192 = sshll.u32 %s3, 4
      %s193 = int_to_ptr.hbm [resolvable:$true] %s192
      %195 = dma.vmem_to_hbm [thread:$0]  %s191, 32, %s193, [#allocation11]
    $region33: #{tpu_custom_call.1} parent=1 // pred_fallthru
      _
    // Predicated region
    $region34: #{tpu_custom_call.1} parent=1 // pred_check
      _
    $region35: #{tpu_custom_call.1} parent=1 // pred_check_branch
      %197 = sbr.rel (0) target = $region37
    $region36: #{tpu_custom_call.1} parent=1 // pred_region
      %199 = dma.done [#allocation6], 32
    $region37: #{tpu_custom_call.1} parent=1 // pred_fallthru
      _
    // Predicated region
    $region38: #{tpu_custom_call.1} parent=1 // pred_check
      _
    $region39: #{tpu_custom_call.1} parent=1 // pred_check_branch
      %201 = sbr.rel (0) target = $region41
    $region40: #{tpu_custom_call.1} parent=1 // pred_region
      %203 = dma.done [#allocation11], 32
    $region41: #{tpu_custom_call.1} parent=1 // pred_fallthru
      _
    %204 = vsyncpa [#allocation5], 1
    %205 = vsyncpa [#allocation8], 1
    %206 = vsyncpa [#allocation6], 1
    %207 = vsyncpa [#allocation11], 1

</llo_original>
